<compile_context>
chip_gen: v7x
topology: tpu7x:2x2x1
jax: 0.10.0
libtpu: 0.0.40
codegen_flags: <defaults>
</compile_context>

<pallas_src>
import numpy as np
import jax
import jax.numpy as jnp
from jax import lax
from jax.experimental import pallas as pl
from jax.experimental.pallas import tpu as pltpu

# ------------- config, consistent with AugmentMelSTFT's small setup -------------
N_MELS = 32
SR = 8000
WIN_LENGTH = 200
HOPSIZE = 80
N_FFT = 256
FMIN = 0.0
FMIN_AUG_RANGE = 1
FMAX_AUG_RANGE = 10
# Eval mode uses fmax = self.fmax; with fmax=None the module sets
# self.fmax = sr // 2 - fmax_aug_range // 2 (spec-faithful to forward()).
FMAX = SR // 2 - FMAX_AUG_RANGE // 2
# Onesided STFT has n_fft//2 + 1 bins, but the mel basis is zero-padded on the
# Nyquist bin, so it contributes nothing -> keep only the first n_fft//2 bins.
N_FREQS = N_FFT // 2                    # 128, lane-aligned


def _round_up(x, m):
    return ((x + m - 1) // m) * m


# ----------------------------- deterministic buffers -----------------------------
def kaldi_mel_banks(num_bins, n_fft, sample_freq, low_freq, high_freq):
    # torchaudio.compliance.kaldi.get_mel_banks with vtln_warp_factor=1.0
    num_fft_bins = n_fft // 2
    fft_bin_width = sample_freq / n_fft

    def mel(hz):
        return 1127.0 * np.log(1.0 + hz / 700.0)

    mel_low, mel_high = mel(low_freq), mel(high_freq)
    mel_delta = (mel_high - mel_low) / (num_bins + 1)
    b = np.arange(num_bins, dtype=np.float64)[:, None]
    left_mel = mel_low + b * mel_delta
    center_mel = mel_low + (b + 1) * mel_delta
    right_mel = mel_low + (b + 2) * mel_delta
    m = mel(fft_bin_width * np.arange(num_fft_bins, dtype=np.float64))[None, :]
    up_slope = (m - left_mel) / (center_mel - left_mel)
    down_slope = (right_mel - m) / (right_mel - center_mel)
    bins = np.maximum(0.0, np.minimum(up_slope, down_slope))
    return bins.astype(np.float32)          # (num_bins, n_fft // 2)


def build_constants():
    # Hann window (periodic=False), centered in an n_fft-long frame (torch.stft
    # pads win_length -> n_fft symmetrically before applying).
    n = np.arange(WIN_LENGTH, dtype=np.float64)
    win = 0.5 - 0.5 * np.cos(2.0 * np.pi * n / (WIN_LENGTH - 1))
    lpad = (N_FFT - WIN_LENGTH) // 2
    window = np.zeros(N_FFT, dtype=np.float64)
    window[lpad:lpad + WIN_LENGTH] = win

    # Real DFT matrices with the window folded in:
    #   (frames * w) @ C  ==  frames @ (diag(w) @ C)
    t = np.arange(N_FFT, dtype=np.float64)[:, None]
    f = np.arange(N_FREQS, dtype=np.float64)[None, :]
    ang = 2.0 * np.pi * t * f / N_FFT
    cos_w = window[:, None] * np.cos(ang)
    sin_w = window[:, None] * (-np.sin(ang))       # sign irrelevant for |.|^2
    cs_mat = np.concatenate([cos_w, sin_w], axis=1).astype(np.float32)  # (N_FFT, 2*N_FREQS)

    mel_basis = kaldi_mel_banks(N_MELS, N_FFT, SR, FMIN, FMAX)          # (N_MELS, N_FREQS)
    return jnp.asarray(cs_mat), jnp.asarray(mel_basis)


# --------------------------------- Pallas kernel ---------------------------------
def _mel_kernel(frames_ref, cs_ref, melb_ref, out_ref):
    # frames_ref : (TM, N_FFT)          windowed-DFT input rows (frames)
    # cs_ref     : (N_FFT, 2*N_FREQS)   [w*cos | -w*sin], single 256-wide matmul
    # melb_ref   : (N_MELS, N_FREQS)    Kaldi mel filterbank
    # out_ref    : (N_MELS, TM)         lane-dense output (frames on lanes)
    ri = jnp.dot(frames_ref[...], cs_ref[...],
                 preferred_element_type=jnp.float32)        # (TM, 2*N_FREQS)
    re = ri[:, :N_FREQS]                                    # tile-aligned split
    im = ri[:, N_FREQS:]
    power = re * re + im * im                               # |STFT|^2, (TM, N_FREQS)
    # mel_basis @ power.T  -> (N_MELS, TM): MXU produces output already in the
    # lane-dense (n_mels, frames) layout, no in-kernel transpose.
    mel = lax.dot_general(melb_ref[...], power,
                          dimension_numbers=(((1,), (1,)), ((), ())),
                          preferred_element_type=jnp.float32)
    out_ref[...] = (jnp.log(mel + 1e-5) + 4.5) * 0.2


def augment_mel_stft(x, cs_mat, mel_basis):
    """x: (B, T) float32 waveform. Returns (B, n_mels, num_frames) float32."""
    B, T = x.shape

    # pre-emphasis: conv1d with kernel [[[-0.97, 1]]], valid -> length T-1
    y = -0.97 * x[:, :-1] + x[:, 1:]
    L = T - 1

    # torch.stft(center=True, pad_mode='reflect') framing
    pad = N_FFT // 2
    yp = jnp.pad(y, ((0, 0), (pad, pad)), mode="reflect")
    num_frames = 1 + L // HOPSIZE
    idx = (np.arange(num_frames)[:, None] * HOPSIZE
           + np.arange(N_FFT)[None, :])                      # static gather indices
    # TODO(synk): for production-size T/B, build overlapping frames inside the
    # kernel from the padded waveform (memory_space=pl.ANY + pl.ds reads) to
    # avoid materializing the ~3.2x-expanded frames tensor in HBM.
    frames = yp[:, idx].reshape(B * num_frames, N_FFT)       # (M, n_fft)

    M = B * num_frames
    TM = min(512, _round_up(M, 128))                         # row tile (lane-aligned out)
    M_pad = _round_up(M, TM)
    if M_pad != M:
        frames = jnp.pad(frames, ((0, M_pad - M), (0, 0)))
    n_blocks = M_pad // TM

    out = pl.pallas_call(
        _mel_kernel,
        out_shape=jax.ShapeDtypeStruct((N_MELS, M_pad), jnp.float32),
        grid=(n_blocks,),
        in_specs=[
            pl.BlockSpec((TM, N_FFT), lambda i: (i, 0)),
            pl.BlockSpec((N_FFT, 2 * N_FREQS), lambda i: (0, 0)),
            pl.BlockSpec((N_MELS, N_FREQS), lambda i: (0, 0)),
        ],
        out_specs=pl.BlockSpec((N_MELS, TM), lambda i: (0, i)),
        compiler_params=pltpu.CompilerParams(
            dimension_semantics=("parallel",)),
    )(frames, cs_mat, mel_basis)

    # (n_mels, B*num_frames) -> (B, n_mels, num_frames), matching PyTorch layout
    out = out[:, :M].reshape(N_MELS, B, num_frames)
    return jnp.transpose(out, (1, 0, 2))


# ------------------------------------- main -------------------------------------
if __name__ == "__main__":
    key = jax.random.PRNGKey(0)
    B, T = 2, 1600
    x = jax.random.normal(key, (B, T), dtype=jnp.float32)

    cs_mat, mel_basis = build_constants()

    # TODO(synk): training-time FrequencyMasking / TimeMasking and the random
    # fmin/fmax augmentation are eval-mode no-ops and are not implemented.
    out = augment_mel_stft(x, cs_mat, mel_basis)
    out = jax.block_until_ready(out)

    assert out.shape == (B, N_MELS, 1 + (T - 1) // HOPSIZE), out.shape
    assert out.dtype == jnp.float32
    print("KERNEL_OK")
</pallas_src>

<mosaic_0001>
module attributes {stable_mosaic.version = 11 : i64} {
  func.func @_mel_kernel(%arg0: i32, %arg1: memref<128x256xf32, #tpu.memory_space<vmem>>, %arg2: memref<256x256xf32, #tpu.memory_space<vmem>>, %arg3: memref<32x128xf32, #tpu.memory_space<vmem>>, %arg4: memref<32x128xf32, #tpu.memory_space<vmem>>) attributes {dimension_semantics = [#tpu.dimension_semantics<parallel>], iteration_bounds = array<i64: 1>, scalar_prefetch = 0 : i64, scratch_operands = 0 : i64, tpu.core_type = #tpu.core_type<tc>, window_params = [{transform_indices = @transform_0, window_bounds = array<i64: 128, 256>}, {pipeline_mode = #tpu.pipeline_mode<synchronous>, transform_indices = @transform_1, window_bounds = array<i64: 256, 256>}, {pipeline_mode = #tpu.pipeline_mode<synchronous>, transform_indices = @transform_2, window_bounds = array<i64: 32, 128>}, {transform_indices = @transform_3, window_bounds = array<i64: 32, 128>}]} {
    %c0 = arith.constant 0 : index
    %c0_0 = arith.constant 0 : index
    %0 = vector.load %arg1[%c0, %c0_0] : memref<128x256xf32, #tpu.memory_space<vmem>>, vector<128x256xf32>
    %c0_1 = arith.constant 0 : index
    %c0_2 = arith.constant 0 : index
    %1 = vector.load %arg2[%c0_1, %c0_2] : memref<256x256xf32, #tpu.memory_space<vmem>>, vector<256x256xf32>
    %cst = arith.constant dense<0.000000e+00> : vector<128x256xf32>
    %2 = tpu.matmul %0, %1, %cst {dimension_numbers = #tpu.dot_dimension_numbers<[1], [0], [0], [1], [0, 0, 1, 1], [], []>} : vector<128x256xf32>, vector<256x256xf32>, vector<128x256xf32> -> vector<128x256xf32>
    %3 = vector.extract_strided_slice %2 {offsets = [0, 0], sizes = [128, 128], strides = [1, 1]} : vector<128x256xf32> to vector<128x128xf32>
    %4 = vector.extract_strided_slice %2 {offsets = [0, 128], sizes = [128, 128], strides = [1, 1]} : vector<128x256xf32> to vector<128x128xf32>
    %5 = arith.mulf %3, %3 : vector<128x128xf32>
    %6 = arith.mulf %4, %4 : vector<128x128xf32>
    %7 = arith.addf %5, %6 : vector<128x128xf32>
    %c0_3 = arith.constant 0 : index
    %c0_4 = arith.constant 0 : index
    %8 = vector.load %arg3[%c0_3, %c0_4] : memref<32x128xf32, #tpu.memory_space<vmem>>, vector<32x128xf32>
    %cst_5 = arith.constant dense<0.000000e+00> : vector<32x128xf32>
    %9 = tpu.matmul %8, %7, %cst_5 {dimension_numbers = #tpu.dot_dimension_numbers<[1], [1], [0], [0], [0, 0, 1, 0], [], []>} : vector<32x128xf32>, vector<128x128xf32>, vector<32x128xf32> -> vector<32x128xf32>
    %cst_6 = arith.constant 9.99999974E-6 : f32
    %10 = vector.broadcast %cst_6 : f32 to vector<32x128xf32>
    %11 = arith.addf %9, %10 : vector<32x128xf32>
    %12 = math.log %11 : vector<32x128xf32>
    %cst_7 = arith.constant 4.500000e+00 : f32
    %13 = vector.broadcast %cst_7 : f32 to vector<32x128xf32>
    %14 = arith.addf %12, %13 : vector<32x128xf32>
    %cst_8 = arith.constant 2.000000e-01 : f32
    %15 = vector.broadcast %cst_8 : f32 to vector<32x128xf32>
    %16 = arith.mulf %14, %15 : vector<32x128xf32>
    %c0_9 = arith.constant 0 : index
    %c0_10 = arith.constant 0 : index
    %17 = vector.load %arg4[%c0_9, %c0_10] : memref<32x128xf32, #tpu.memory_space<vmem>>, vector<32x128xf32>
    tpu.vector_store %arg4[%c0_9, %c0_10], %16 {strides = array<i32>} : memref<32x128xf32, #tpu.memory_space<vmem>>, vector<32x128xf32>,
    return
  }
  func.func @transform_0(%arg0: i32) -> (i32, i32) {
    %c0_i32 = arith.constant 0 : i32
    %c0_i32_0 = arith.constant 0 : i32
    return %arg0, %c0_i32 : i32, i32
  }
  func.func @transform_1(%arg0: i32) -> (i32, i32) {
    %c0_i32 = arith.constant 0 : i32
    %c0_i32_0 = arith.constant 0 : i32
    %c0_i32_1 = arith.constant 0 : i32
    return %c0_i32, %c0_i32_0 : i32, i32
  }
  func.func @transform_2(%arg0: i32) -> (i32, i32) {
    %c0_i32 = arith.constant 0 : i32
    %c0_i32_0 = arith.constant 0 : i32
    %c0_i32_1 = arith.constant 0 : i32
    return %c0_i32, %c0_i32_0 : i32, i32
  }
  func.func @transform_3(%arg0: i32) -> (i32, i32) {
    %c0_i32 = arith.constant 0 : i32
    %c0_i32_0 = arith.constant 0 : i32
    return %c0_i32, %arg0 : i32, i32
  }
}

</mosaic_0001>

<llo_original>
// kernel: tpu_custom_call.1
$region0: #{tpu_custom_call.1}
  #allocation0 [shape = 'u32[]', space=smem, size = 0x4, offset = 0x4, fixed_abs, tag = 'smem constant byte address 0x4 - core index']
  #allocation1 [shape = 'u32[144,128]{1,0:T(1,128)}', space=vmem, size = 0x12000, scoped, tag = 'internal scratch']
  %s0 = inlined_call_operand.hbm [shape: f32[128,256], index: 0, kind: input, shape index: {}]
  %s1 = inlined_call_operand.hbm [shape: f32[256,256], index: 1, kind: input, shape index: {}]
  %s2 = inlined_call_operand.hbm [shape: f32[32,128], index: 2, kind: input, shape index: {}]
  %s3 = inlined_call_operand.hbm [shape: f32[32,128], index: 3, kind: output, shape index: {}]
  %s4 = sld [smem:[#allocation0]]
  $region34: #{tpu_custom_call.1} parent=0
    _
  %s6 = ssub.s32 1, %s4
  %s7 = scalar_select 0, %s6, %s4
  $region1: #{tpu_custom_call.1} parent=0
    #allocation2 [shape = 'u8[131072]{0}', space=vmem, size = 0x20000, scoped, tag = 'input window, operand 0, single buffered']
    #allocation3 [shape = 's32[1]{0}', space=sflag, size = 0x4, scoped, tag = 'scoped memory for tpu_custom_call.1']
    #allocation4 [shape = 's32[1]{0}', space=sflag, size = 0x4, scoped, tag = 'scoped memory for tpu_custom_call.1']
    #allocation5 [shape = 'u8[262144]{0}', space=vmem, size = 0x40000, scoped, tag = 'input window, operand 1, single buffered']
    #allocation6 [shape = 's32[1]{0}', space=sflag, size = 0x4, scoped, tag = 'scoped memory for tpu_custom_call.1']
    #allocation7 [shape = 'u8[16384]{0}', space=vmem, size = 0x4000, scoped, tag = 'input window, operand 2, single buffered']
    #allocation8 [shape = 'u8[16384]{0}', space=vmem, size = 0x4000, scoped, tag = 'output window, operand 0, single buffered']
    %8 = vsyncpa [#allocation3], 0
    %9 = vsyncpa [#allocation6], 0
    %10 = vsyncpa [#allocation4], 0
    // Predicated region
    $region2: #{tpu_custom_call.1} parent=1 // pred_check
      _
    $region3: #{tpu_custom_call.1} parent=1 // pred_check_branch
      %12 = sbr.rel (0) target = $region5
    $region4: #{tpu_custom_call.1} parent=1 // pred_region
      %s14 = ssub.s32 4096, 4096
      %15 = vsyncadd [#allocation3], %s14
      %s16 = sshll.u32 [#allocation2], 4
      %s17 = int_to_ptr.vmem [resolvable:$true] %s16
      %22 = dma.hbm_to_vmem [thread:$0]  %s0, 4096, %s17, [#allocation3], 256, 256, 16
    $region5: #{tpu_custom_call.1} parent=1 // pred_fallthru
      _
    // Predicated region
    $region6: #{tpu_custom_call.1} parent=1 // pred_check
      _
    $region7: #{tpu_custom_call.1} parent=1 // pred_check_branch
      %24 = sbr.rel (0) target = $region9
    $region8: #{tpu_custom_call.1} parent=1 // pred_region
      %s26 = ssub.s32 8192, 8192
      %27 = vsyncadd [#allocation6], %s26
      %s28 = sshll.u32 [#allocation5], 4
      %s29 = int_to_ptr.vmem [resolvable:$true] %s28
      %34 = dma.hbm_to_vmem [thread:$0]  %s1, 8192, %s29, [#allocation6], 256, 256, 16
    $region9: #{tpu_custom_call.1} parent=1 // pred_fallthru
      _
    // Predicated region
    $region10: #{tpu_custom_call.1} parent=1 // pred_check
      _
    $region11: #{tpu_custom_call.1} parent=1 // pred_check_branch
      %36 = sbr.rel (0) target = $region13
    $region12: #{tpu_custom_call.1} parent=1 // pred_region
      %s38 = ssub.s32 512, 512
      %39 = vsyncadd [#allocation6], %s38
      %s40 = sshll.u32 [#allocation7], 4
      %s41 = int_to_ptr.vmem [resolvable:$true] %s40
      %46 = dma.hbm_to_vmem [thread:$0]  %s2, 512, %s41, [#allocation6], 128, 128, 8
    $region13: #{tpu_custom_call.1} parent=1 // pred_fallthru
      _
    // Predicated region
    $region14: #{tpu_custom_call.1} parent=1 // pred_check
      _
    $region15: #{tpu_custom_call.1} parent=1 // pred_check_branch
      %48 = sbr.rel (0) target = $region17
    $region16: #{tpu_custom_call.1} parent=1 // pred_region
      %49 = dma.done [#allocation3], 4096
    $region17: #{tpu_custom_call.1} parent=1 // pred_fallthru
      _
    // Predicated region
    $region18: #{tpu_custom_call.1} parent=1 // pred_check
      _
    $region19: #{tpu_custom_call.1} parent=1 // pred_check_branch
      %51 = sbr.rel (0) target = $region21
    $region20: #{tpu_custom_call.1} parent=1 // pred_region
      %52 = dma.done [#allocation6], 8192
    $region21: #{tpu_custom_call.1} parent=1 // pred_fallthru
      _
    // Predicated region
    $region22: #{tpu_custom_call.1} parent=1 // pred_check
      _
    $region23: #{tpu_custom_call.1} parent=1 // pred_check_branch
      %54 = sbr.rel (0) target = $region25
    $region24: #{tpu_custom_call.1} parent=1 // pred_region
      %55 = dma.done [#allocation6], 512
    $region25: #{tpu_custom_call.1} parent=1 // pred_fallthru
      _
    %v56 = vld [vmem:[#allocation2] sm:$0xff]
    %v57 = vld [vmem:[#allocation2 + $0x8] sm:$0xff]
    %v58 = vld [vmem:[#allocation2 + $0x10] sm:$0xff]
    %v59 = vld [vmem:[#allocation2 + $0x18] sm:$0xff]
    %v60 = vld [vmem:[#allocation2 + $0x20] sm:$0xff]
    %v61 = vld [vmem:[#allocation2 + $0x28] sm:$0xff]
    %v62 = vld [vmem:[#allocation2 + $0x30] sm:$0xff]
    %v63 = vld [vmem:[#allocation2 + $0x38] sm:$0xff]
    %v64 = vld [vmem:[#allocation2 + $0x40] sm:$0xff]
    %v65 = vld [vmem:[#allocation2 + $0x48] sm:$0xff]
    %v66 = vld [vmem:[#allocation2 + $0x50] sm:$0xff]
    %v67 = vld [vmem:[#allocation2 + $0x58] sm:$0xff]
    %v68 = vld [vmem:[#allocation2 + $0x60] sm:$0xff]
    %v69 = vld [vmem:[#allocation2 + $0x68] sm:$0xff]
    %v70 = vld [vmem:[#allocation2 + $0x70] sm:$0xff]
    %v71 = vld [vmem:[#allocation2 + $0x78] sm:$0xff]
    %v72 = vld [vmem:[#allocation2 + $0x80] sm:$0xff]
    %v73 = vld [vmem:[#allocation2 + $0x88] sm:$0xff]
    %v74 = vld [vmem:[#allocation2 + $0x90] sm:$0xff]
    %v75 = vld [vmem:[#allocation2 + $0x98] sm:$0xff]
    %v76 = vld [vmem:[#allocation2 + $0xa0] sm:$0xff]
    %v77 = vld [vmem:[#allocation2 + $0xa8] sm:$0xff]
    %v78 = vld [vmem:[#allocation2 + $0xb0] sm:$0xff]
    %v79 = vld [vmem:[#allocation2 + $0xb8] sm:$0xff]
    %v80 = vld [vmem:[#allocation2 + $0xc0] sm:$0xff]
    %v81 = vld [vmem:[#allocation2 + $0xc8] sm:$0xff]
    %v82 = vld [vmem:[#allocation2 + $0xd0] sm:$0xff]
    %v83 = vld [vmem:[#allocation2 + $0xd8] sm:$0xff]
    %v84 = vld [vmem:[#allocation2 + $0xe0] sm:$0xff]
    %v85 = vld [vmem:[#allocation2 + $0xe8] sm:$0xff]
    %v86 = vld [vmem:[#allocation2 + $0xf0] sm:$0xff]
    %v87 = vld [vmem:[#allocation2 + $0xf8] sm:$0xff]
    %v88 = vld [vmem:[#allocation5] sm:$0xff]
    %v89 = vld [vmem:[#allocation5 + $0x8] sm:$0xff]
    %v90 = vld [vmem:[#allocation5 + $0x10] sm:$0xff]
    %v91 = vld [vmem:[#allocation5 + $0x18] sm:$0xff]
    %v92 = vld [vmem:[#allocation5 + $0x20] sm:$0xff]
    %v93 = vld [vmem:[#allocation5 + $0x28] sm:$0xff]
    %v94 = vld [vmem:[#allocation5 + $0x30] sm:$0xff]
    %v95 = vld [vmem:[#allocation5 + $0x38] sm:$0xff]
    %v96 = vld [vmem:[#allocation5 + $0x40] sm:$0xff]
    %v97 = vld [vmem:[#allocation5 + $0x48] sm:$0xff]
    %v98 = vld [vmem:[#allocation5 + $0x50] sm:$0xff]
    %v99 = vld [vmem:[#allocation5 + $0x58] sm:$0xff]
    %v100 = vld [vmem:[#allocation5 + $0x60] sm:$0xff]
    %v101 = vld [vmem:[#allocation5 + $0x68] sm:$0xff]
    %v102 = vld [vmem:[#allocation5 + $0x70] sm:$0xff]
    %v103 = vld [vmem:[#allocation5 + $0x78] sm:$0xff]
    %v104 = vld [vmem:[#allocation5 + $0x80] sm:$0xff]
    %v105 = vld [vmem:[#allocation5 + $0x88] sm:$0xff]
    %v106 = vld [vmem:[#allocation5 + $0x90] sm:$0xff]
    %v107 = vld [vmem:[#allocation5 + $0x98] sm:$0xff]
    %v108 = vld [vmem:[#allocation5 + $0xa0] sm:$0xff]
    %v109 = vld [vmem:[#allocation5 + $0xa8] sm:$0xff]
    %v110 = vld [vmem:[#allocation5 + $0xb0] sm:$0xff]
    %v111 = vld [vmem:[#allocation5 + $0xb8] sm:$0xff]
    %v112 = vld [vmem:[#allocation5 + $0xc0] sm:$0xff]
    %v113 = vld [vmem:[#allocation5 + $0xc8] sm:$0xff]
    %v114 = vld [vmem:[#allocation5 + $0xd0] sm:$0xff]
    %v115 = vld [vmem:[#allocation5 + $0xd8] sm:$0xff]
    %v116 = vld [vmem:[#allocation5 + $0xe0] sm:$0xff]
    %v117 = vld [vmem:[#allocation5 + $0xe8] sm:$0xff]
    %v118 = vld [vmem:[#allocation5 + $0xf0] sm:$0xff]
    %v119 = vld [vmem:[#allocation5 + $0xf8] sm:$0xff]
    %v120 = vld [vmem:[#allocation5 + $0x100] sm:$0xff]
    %v121 = vld [vmem:[#allocation5 + $0x108] sm:$0xff]
    %v122 = vld [vmem:[#allocation5 + $0x110] sm:$0xff]
    %v123 = vld [vmem:[#allocation5 + $0x118] sm:$0xff]
    %v124 = vld [vmem:[#allocation5 + $0x120] sm:$0xff]
    %v125 = vld [vmem:[#allocation5 + $0x128] sm:$0xff]
    %v126 = vld [vmem:[#allocation5 + $0x130] sm:$0xff]
    %v127 = vld [vmem:[#allocation5 + $0x138] sm:$0xff]
    %v128 = vld [vmem:[#allocation5 + $0x140] sm:$0xff]
    %v129 = vld [vmem:[#allocation5 + $0x148] sm:$0xff]
    %v130 = vld [vmem:[#allocation5 + $0x150] sm:$0xff]
    %v131 = vld [vmem:[#allocation5 + $0x158] sm:$0xff]
    %v132 = vld [vmem:[#allocation5 + $0x160] sm:$0xff]
    %v133 = vld [vmem:[#allocation5 + $0x168] sm:$0xff]
    %v134 = vld [vmem:[#allocation5 + $0x170] sm:$0xff]
    %v135 = vld [vmem:[#allocation5 + $0x178] sm:$0xff]
    %v136 = vld [vmem:[#allocation5 + $0x180] sm:$0xff]
    %v137 = vld [vmem:[#allocation5 + $0x188] sm:$0xff]
    %v138 = vld [vmem:[#allocation5 + $0x190] sm:$0xff]
    %v139 = vld [vmem:[#allocation5 + $0x198] sm:$0xff]
    %v140 = vld [vmem:[#allocation5 + $0x1a0] sm:$0xff]
    %v141 = vld [vmem:[#allocation5 + $0x1a8] sm:$0xff]
    %v142 = vld [vmem:[#allocation5 + $0x1b0] sm:$0xff]
    %v143 = vld [vmem:[#allocation5 + $0x1b8] sm:$0xff]
    %v144 = vld [vmem:[#allocation5 + $0x1c0] sm:$0xff]
    %v145 = vld [vmem:[#allocation5 + $0x1c8] sm:$0xff]
    %v146 = vld [vmem:[#allocation5 + $0x1d0] sm:$0xff]
    %v147 = vld [vmem:[#allocation5 + $0x1d8] sm:$0xff]
    %v148 = vld [vmem:[#allocation5 + $0x1e0] sm:$0xff]
    %v149 = vld [vmem:[#allocation5 + $0x1e8] sm:$0xff]
    %v150 = vld [vmem:[#allocation5 + $0x1f0] sm:$0xff]
    %v151 = vld [vmem:[#allocation5 + $0x1f8] sm:$0xff]
    %152 = vmatprep.subr.mxu0 %v89
    %153 = vmatpush1.msra.mxu0 %v88
    %154 = vmatprep.subr.mxu0 %v91
    %155 = vmatpush1.msra.mxu0 %v90
    %156 = vmatprep.subr.mxu0 %v93
    %157 = vmatpush1.msra.mxu0 %v92
    %158 = vmatprep.subr.mxu0 %v95
    %159 = vmatpush1.msra.mxu0 %v94
    %160 = vmatprep.subr.mxu0 %v97
    %161 = vmatpush1.msra.mxu0 %v96
    %162 = vmatprep.subr.mxu0 %v99
    %163 = vmatpush1.msra.mxu0 %v98
    %164 = vmatprep.subr.mxu0 %v101
    %165 = vmatpush1.msra.mxu0 %v100
    %166 = vmatprep.subr.mxu0 %v103
    %167 = vmatpush1.msra.mxu0 %v102
    %168 = vmatprep.subr.mxu0 %v105
    %169 = vmatpush1.msra.mxu0 %v104
    %170 = vmatprep.subr.mxu0 %v107
    %171 = vmatpush1.msra.mxu0 %v106
    %172 = vmatprep.subr.mxu0 %v109
    %173 = vmatpush1.msra.mxu0 %v108
    %174 = vmatprep.subr.mxu0 %v111
    %175 = vmatpush1.msra.mxu0 %v110
    %176 = vmatprep.subr.mxu0 %v113
    %177 = vmatpush1.msra.mxu0 %v112
    %178 = vmatprep.subr.mxu0 %v115
    %179 = vmatpush1.msra.mxu0 %v114
    %180 = vmatprep.subr.mxu0 %v117
    %181 = vmatpush1.msra.mxu0 %v116
    %182 = vmatprep.subr.mxu0 %v119
    %183 = vmatpush1.msra.mxu0 %v118
    %184 = vmatprep.subr.mxu0 %v121
    %185 = vmatpush1.msra.mxu0 %v120
    %186 = vmatprep.subr.mxu0 %v123
    %187 = vmatpush1.msra.mxu0 %v122
    %188 = vmatprep.subr.mxu0 %v125
    %189 = vmatpush1.msra.mxu0 %v124
    %190 = vmatprep.subr.mxu0 %v127
    %191 = vmatpush1.msra.mxu0 %v126
    %192 = vmatprep.subr.mxu0 %v129
    %193 = vmatpush1.msra.mxu0 %v128
    %194 = vmatprep.subr.mxu0 %v131
    %195 = vmatpush1.msra.mxu0 %v130
    %196 = vmatprep.subr.mxu0 %v133
    %197 = vmatpush1.msra.mxu0 %v132
    %198 = vmatprep.subr.mxu0 %v135
    %199 = vmatpush1.msra.mxu0 %v134
    %200 = vmatprep.subr.mxu0 %v137
    %201 = vmatpush1.msra.mxu0 %v136
    %202 = vmatprep.subr.mxu0 %v139
    %203 = vmatpush1.msra.mxu0 %v138
    %204 = vmatprep.subr.mxu0 %v141
    %205 = vmatpush1.msra.mxu0 %v140
    %206 = vmatprep.subr.mxu0 %v143
    %207 = vmatpush1.msra.mxu0 %v142
    %208 = vmatprep.subr.mxu0 %v145
    %209 = vmatpush1.msra.mxu0 %v144
    %210 = vmatprep.subr.mxu0 %v147
    %211 = vmatpush1.msra.mxu0 %v146
    %212 = vmatprep.subr.mxu0 %v149
    %213 = vmatpush1.msra.mxu0 %v148
    %214 = vmatprep.subr.mxu0 %v151
    %215 = vmatpush1.msra.mxu0 %v150
    %216 = vmatprep.mubr.f32.mxu0 %v57
    %217 = vmatmul.mubr.f32.gmra.mrb[0].mxu0 %v56
    %v218 = vpop.f32.mrb[0].mxu0
    %v219 = vadd.f32 0.0, %v218
    %v220 = vpop.f32.mrb[0].mxu0
    %v221 = vadd.f32 0.0, %v220
    %222 = vmatprep.mubr.f32.mxu0 %v59
    %223 = vmatmul.mubr.f32.gmra.mrb[0].mxu0 %v58
    %v224 = vpop.f32.mrb[0].mxu0
    %v225 = vadd.f32 0.0, %v224
    %v226 = vpop.f32.mrb[0].mxu0
    %v227 = vadd.f32 0.0, %v226
    %228 = vmatprep.mubr.f32.mxu0 %v61
    %229 = vmatmul.mubr.f32.gmra.mrb[0].mxu0 %v60
    %v230 = vpop.f32.mrb[0].mxu0
    %v231 = vadd.f32 0.0, %v230
    %v232 = vpop.f32.mrb[0].mxu0
    %v233 = vadd.f32 0.0, %v232
    %234 = vmatprep.mubr.f32.mxu0 %v63
    %235 = vmatmul.mubr.f32.gmra.mrb[0].mxu0 %v62
    %v236 = vpop.f32.mrb[0].mxu0
    %v237 = vadd.f32 0.0, %v236
    %v238 = vpop.f32.mrb[0].mxu0
    %v239 = vadd.f32 0.0, %v238
    %240 = vmatprep.mubr.f32.mxu0 %v65
    %241 = vmatmul.mubr.f32.gmra.mrb[0].mxu0 %v64
    %v242 = vpop.f32.mrb[0].mxu0
    %v243 = vadd.f32 0.0, %v242
    %v244 = vpop.f32.mrb[0].mxu0
    %v245 = vadd.f32 0.0, %v244
    %246 = vmatprep.mubr.f32.mxu0 %v67
    %247 = vmatmul.mubr.f32.gmra.mrb[0].mxu0 %v66
    %v248 = vpop.f32.mrb[0].mxu0
    %v249 = vadd.f32 0.0, %v248
    %v250 = vpop.f32.mrb[0].mxu0
    %v251 = vadd.f32 0.0, %v250
    %252 = vmatprep.mubr.f32.mxu0 %v69
    %253 = vmatmul.mubr.f32.gmra.mrb[0].mxu0 %v68
    %v254 = vpop.f32.mrb[0].mxu0
    %v255 = vadd.f32 0.0, %v254
    %v256 = vpop.f32.mrb[0].mxu0
    %v257 = vadd.f32 0.0, %v256
    %258 = vmatprep.mubr.f32.mxu0 %v71
    %259 = vmatmul.mubr.f32.gmra.mrb[0].mxu0 %v70
    %v260 = vpop.f32.mrb[0].mxu0
    %v261 = vadd.f32 0.0, %v260
    %v262 = vpop.f32.mrb[0].mxu0
    %v263 = vadd.f32 0.0, %v262
    %264 = vmatprep.mubr.f32.mxu0 %v73
    %265 = vmatmul.mubr.f32.gmra.mrb[0].mxu0 %v72
    %v266 = vpop.f32.mrb[0].mxu0
    %v267 = vadd.f32 0.0, %v266
    %v268 = vpop.f32.mrb[0].mxu0
    %v269 = vadd.f32 0.0, %v268
    %270 = vmatprep.mubr.f32.mxu0 %v75
    %271 = vmatmul.mubr.f32.gmra.mrb[0].mxu0 %v74
    %v272 = vpop.f32.mrb[0].mxu0
    %v273 = vadd.f32 0.0, %v272
    %v274 = vpop.f32.mrb[0].mxu0
    %v275 = vadd.f32 0.0, %v274
    %276 = vmatprep.mubr.f32.mxu0 %v77
    %277 = vmatmul.mubr.f32.gmra.mrb[0].mxu0 %v76
    %v278 = vpop.f32.mrb[0].mxu0
    %v279 = vadd.f32 0.0, %v278
    %v280 = vpop.f32.mrb[0].mxu0
    %v281 = vadd.f32 0.0, %v280
    %282 = vmatprep.mubr.f32.mxu0 %v79
    %283 = vmatmul.mubr.f32.gmra.mrb[0].mxu0 %v78
    %v284 = vpop.f32.mrb[0].mxu0
    %v285 = vadd.f32 0.0, %v284
    %v286 = vpop.f32.mrb[0].mxu0
    %v287 = vadd.f32 0.0, %v286
    %288 = vmatprep.mubr.f32.mxu0 %v81
    %289 = vmatmul.mubr.f32.gmra.mrb[0].mxu0 %v80
    %v290 = vpop.f32.mrb[0].mxu0
    %v291 = vadd.f32 0.0, %v290
    %v292 = vpop.f32.mrb[0].mxu0
    %v293 = vadd.f32 0.0, %v292
    %294 = vmatprep.mubr.f32.mxu0 %v83
    %295 = vmatmul.mubr.f32.gmra.mrb[0].mxu0 %v82
    %v296 = vpop.f32.mrb[0].mxu0
    %v297 = vadd.f32 0.0, %v296
    %v298 = vpop.f32.mrb[0].mxu0
    %v299 = vadd.f32 0.0, %v298
    %300 = vmatprep.mubr.f32.mxu0 %v85
    %301 = vmatmul.mubr.f32.gmra.mrb[0].mxu0 %v84
    %v302 = vpop.f32.mrb[0].mxu0
    %v303 = vadd.f32 0.0, %v302
    %v304 = vpop.f32.mrb[0].mxu0
    %v305 = vadd.f32 0.0, %v304
    %306 = vmatprep.mubr.f32.mxu0 %v87
    %307 = vmatmul.mubr.f32.gmra.mrb[0].mxu0 %v86
    %v308 = vpop.f32.mrb[0].mxu0
    %v309 = vadd.f32 0.0, %v308
    %v310 = vpop.f32.mrb[0].mxu0
    %v311 = vadd.f32 0.0, %v310
    %312 = vdwg.mxu0
    %v313 = vmul.f32 %v219, %v219
    %v314 = vmul.f32 %v225, %v225
    %v315 = vmul.f32 %v231, %v231
    %v316 = vmul.f32 %v237, %v237
    %v317 = vmul.f32 %v243, %v243
    %v318 = vmul.f32 %v249, %v249
    %v319 = vmul.f32 %v255, %v255
    %v320 = vmul.f32 %v261, %v261
    %v321 = vmul.f32 %v267, %v267
    %v322 = vmul.f32 %v273, %v273
    %v323 = vmul.f32 %v279, %v279
    %v324 = vmul.f32 %v285, %v285
    %v325 = vmul.f32 %v291, %v291
    %v326 = vmul.f32 %v297, %v297
    %v327 = vmul.f32 %v303, %v303
    %v328 = vmul.f32 %v309, %v309
    %v329 = vmul.f32 %v221, %v221
    %v330 = vmul.f32 %v227, %v227
    %v331 = vmul.f32 %v233, %v233
    %v332 = vmul.f32 %v239, %v239
    %v333 = vmul.f32 %v245, %v245
    %v334 = vmul.f32 %v251, %v251
    %v335 = vmul.f32 %v257, %v257
    %v336 = vmul.f32 %v263, %v263
    %v337 = vmul.f32 %v269, %v269
    %v338 = vmul.f32 %v275, %v275
    %v339 = vmul.f32 %v281, %v281
    %v340 = vmul.f32 %v287, %v287
    %v341 = vmul.f32 %v293, %v293
    %v342 = vmul.f32 %v299, %v299
    %v343 = vmul.f32 %v305, %v305
    %v344 = vmul.f32 %v311, %v311
    %v345 = vadd.f32 %v313, %v329
    %v346 = vadd.f32 %v314, %v330
    %v347 = vadd.f32 %v315, %v331
    %v348 = vadd.f32 %v316, %v332
    %v349 = vadd.f32 %v317, %v333
    %v350 = vadd.f32 %v318, %v334
    %v351 = vadd.f32 %v319, %v335
    %v352 = vadd.f32 %v320, %v336
    %v353 = vadd.f32 %v321, %v337
    %v354 = vadd.f32 %v322, %v338
    %v355 = vadd.f32 %v323, %v339
    %v356 = vadd.f32 %v324, %v340
    %v357 = vadd.f32 %v325, %v341
    %v358 = vadd.f32 %v326, %v342
    %v359 = vadd.f32 %v327, %v343
    %v360 = vadd.f32 %v328, %v344
    %v361 = vld [vmem:[#allocation7] sm:$0xff]
    %v362 = vld [vmem:[#allocation7 + $0x8] sm:$0xff]
    %v363 = vld [vmem:[#allocation7 + $0x10] sm:$0xff]
    %v364 = vld [vmem:[#allocation7 + $0x18] sm:$0xff]
    %365 = vmatprep.subr.mxu0 0.0
    %366 = vmatpush1.xpose.msra.mxu0 %v345
    %367 = vmatprep.subr.mxu0 0.0
    %368 = vmatpush1.xpose.msra.mxu0 %v346
    %369 = vmatprep.subr.mxu0 0.0
    %370 = vmatpush1.xpose.msra.mxu0 %v347
    %371 = vmatprep.subr.mxu0 0.0
    %372 = vmatpush1.xpose.msra.mxu0 %v348
    %373 = vmatprep.subr.mxu0 0.0
    %374 = vmatpush1.xpose.msra.mxu0 %v349
    %375 = vmatprep.subr.mxu0 0.0
    %376 = vmatpush1.xpose.msra.mxu0 %v350
    %377 = vmatprep.subr.mxu0 0.0
    %378 = vmatpush1.xpose.msra.mxu0 %v351
    %379 = vmatprep.subr.mxu0 0.0
    %380 = vmatpush1.xpose.msra.mxu0 %v352
    %381 = vmatprep.subr.mxu0 0.0
    %382 = vmatpush1.xpose.msra.mxu0 %v353
    %383 = vmatprep.subr.mxu0 0.0
    %384 = vmatpush1.xpose.msra.mxu0 %v354
    %385 = vmatprep.subr.mxu0 0.0
    %386 = vmatpush1.xpose.msra.mxu0 %v355
    %387 = vmatprep.subr.mxu0 0.0
    %388 = vmatpush1.xpose.msra.mxu0 %v356
    %389 = vmatprep.subr.mxu0 0.0
    %390 = vmatpush1.xpose.msra.mxu0 %v357
    %391 = vmatprep.subr.mxu0 0.0
    %392 = vmatpush1.xpose.msra.mxu0 %v358
    %393 = vmatprep.subr.mxu0 0.0
    %394 = vmatpush1.xpose.msra.mxu0 %v359
    %395 = vmatprep.subr.mxu0 0.0
    %396 = vmatpush1.xpose.msra.mxu0 %v360
    %397 = vmatprep.subr.mxu0 0.0
    %398 = vmatpush1.xpose.msra.mxu0 0.0
    %399 = vmatprep.subr.mxu0 0.0
    %400 = vmatpush1.xpose.msra.mxu0 0.0
    %401 = vmatprep.subr.mxu0 0.0
    %402 = vmatpush1.xpose.msra.mxu0 0.0
    %403 = vmatprep.subr.mxu0 0.0
    %404 = vmatpush1.xpose.msra.mxu0 0.0
    %405 = vmatprep.subr.mxu0 0.0
    %406 = vmatpush1.xpose.msra.mxu0 0.0
    %407 = vmatprep.subr.mxu0 0.0
    %408 = vmatpush1.xpose.msra.mxu0 0.0
    %409 = vmatprep.subr.mxu0 0.0
    %410 = vmatpush1.xpose.msra.mxu0 0.0
    %411 = vmatprep.subr.mxu0 0.0
    %412 = vmatpush1.xpose.msra.mxu0 0.0
    %413 = vmatprep.subr.mxu0 0.0
    %414 = vmatpush1.xpose.msra.mxu0 0.0
    %415 = vmatprep.subr.mxu0 0.0
    %416 = vmatpush1.xpose.msra.mxu0 0.0
    %417 = vmatprep.subr.mxu0 0.0
    %418 = vmatpush1.xpose.msra.mxu0 0.0
    %419 = vmatprep.subr.mxu0 0.0
    %420 = vmatpush1.xpose.msra.mxu0 0.0
    %421 = vmatprep.subr.mxu0 0.0
    %422 = vmatpush1.xpose.msra.mxu0 0.0
    %423 = vmatprep.subr.mxu0 0.0
    %424 = vmatpush1.xpose.msra.mxu0 0.0
    %425 = vmatprep.subr.mxu0 0.0
    %426 = vmatpush1.xpose.msra.mxu0 0.0
    %427 = vmatprep.subr.mxu0 0.0
    %428 = vmatpush1.xpose.msra.mxu0 0.0
    %429 = vmatprep.mubr.f32.mxu0 0.0
    %430 = vmatmul.mubr.f32.gmra.mrb[0].mxu0 %v361
    %v431 = vpop.f32.mrb[0].mxu0
    %v432 = vadd.f32 1e-05, %v431
    %v433 = vpop.f32.mrb[0].mxu0
    %434 = vmatprep.mubr.f32.mxu0 0.0
    %435 = vmatmul.mubr.f32.gmra.mrb[0].mxu0 %v362
    %v436 = vpop.f32.mrb[0].mxu0
    %v437 = vadd.f32 1e-05, %v436
    %v438 = vpop.f32.mrb[0].mxu0
    %439 = vmatprep.mubr.f32.mxu0 0.0
    %440 = vmatmul.mubr.f32.gmra.mrb[0].mxu0 %v363
    %v441 = vpop.f32.mrb[0].mxu0
    %v442 = vadd.f32 1e-05, %v441
    %v443 = vpop.f32.mrb[0].mxu0
    %444 = vmatprep.mubr.f32.mxu0 0.0
    %445 = vmatmul.mubr.f32.gmra.mrb[0].mxu0 %v364
    %v446 = vpop.f32.mrb[0].mxu0
    %v447 = vadd.f32 1e-05, %v446
    %v448 = vpop.f32.mrb[0].mxu0
    %449 = vdwg.mxu0
    %v450 = vlog2.pop %v432
    %v451 = vmul.f32 %v450, 0.6931472
    %v452 = vlog2.pop %v437
    %v453 = vmul.f32 %v452, 0.6931472
    %v454 = vlog2.pop %v442
    %v455 = vmul.f32 %v454, 0.6931472
    %v456 = vlog2.pop %v447
    %v457 = vmul.f32 %v456, 0.6931472
    %v458 = vadd.f32 %v451, 4.5
    %v459 = vadd.f32 %v453, 4.5
    %v460 = vadd.f32 %v455, 4.5
    %v461 = vadd.f32 %v457, 4.5
    %v462 = vmul.f32 %v458, 0.2
    %v463 = vmul.f32 %v459, 0.2
    %v464 = vmul.f32 %v460, 0.2
    %v465 = vmul.f32 %v461, 0.2
    %466 = vst [vmem:[#allocation8] sm:$0xff] %v462
    %467 = vst [vmem:[#allocation8 + $0x8] sm:$0xff] %v463
    %468 = vst [vmem:[#allocation8 + $0x10] sm:$0xff] %v464
    %469 = vst [vmem:[#allocation8 + $0x18] sm:$0xff] %v465
    // Predicated region
    $region26: #{tpu_custom_call.1} parent=1 // pred_check
      _
    $region27: #{tpu_custom_call.1} parent=1 // pred_check_branch
      %471 = sbr.rel (0) target = $region29
    $region28: #{tpu_custom_call.1} parent=1 // pred_region
      %s473 = ssub.s32 512, 512
      %474 = vsyncadd [#allocation4], %s473
      %s475 = sshll.u32 [#allocation8], 4
      %s476 = int_to_ptr.vmem [resolvable:$true] %s475
      %481 = dma.vmem_to_hbm [thread:$0]  %s476, 512, %s3, [#allocation4], 128, 128, 8
    $region29: #{tpu_custom_call.1} parent=1 // pred_fallthru
      _
    // Predicated region
    $region30: #{tpu_custom_call.1} parent=1 // pred_check
      _
    $region31: #{tpu_custom_call.1} parent=1 // pred_check_branch
      %483 = sbr.rel (0) target = $region33
    $region32: #{tpu_custom_call.1} parent=1 // pred_region
      %484 = dma.done [#allocation4], 512
    $region33: #{tpu_custom_call.1} parent=1 // pred_fallthru
      _
    %485 = vsyncpa [#allocation3], 1
    %486 = vsyncpa [#allocation6], 1
    %487 = vsyncpa [#allocation4], 1

</llo_original>
